<compile_context>
chip_gen: v7x
topology: tpu7x:2x2x1
jax: 0.10.0
libtpu: 0.0.40
codegen_flags: <defaults>
</compile_context>

<pallas_src>
import functools

import jax
import jax.numpy as jnp
from jax.experimental import pallas as pl
from jax.experimental.pallas import tpu as pltpu


def _round_up(x, m):
    return (x + m - 1) // m * m


def _pick_m_tile(m):
    """Row tile (multiple of 16 for bf16 sublane packing) and padded M."""
    m16 = _round_up(m, 16)
    tm = m16 if m16 <= 512 else 512
    return tm, _round_up(m, tm)


def _pick_tile(total, cap):
    """Largest multiple of 128 (<= cap) dividing `total` (total % 128 == 0)."""
    start = min(cap, total)
    for t in range(start, 127, -128):
        if total % t == 0:
            return t
    return 128


# ----------------------------------------------------------------------------
# Kernel 1: tiled GEMM (patches @ weights) + per-M-tile partial BN statistics.
#   grid = (M_tiles, N_tiles, K_tiles); K innermost ("arbitrary"),
#   bf16 MXU inputs, f32 accumulation directly in the resident output block.
# ----------------------------------------------------------------------------
def _gemm_stats_kernel(p_ref, w_ref, y_ref, st_ref):
    k = pl.program_id(2)

    @pl.when(k == 0)
    def _():
        y_ref[...] = jnp.zeros_like(y_ref)

    y_ref[...] += jnp.dot(p_ref[...], w_ref[...],
                          preferred_element_type=jnp.float32)

    @pl.when(k == pl.num_programs(2) - 1)
    def _():
        y = y_ref[...]
        s = jnp.sum(y, axis=0, keepdims=True)        # (1, TN)
        ss = jnp.sum(y * y, axis=0, keepdims=True)   # (1, TN)
        st_ref[...] = jnp.concatenate([s, ss], axis=0).reshape(st_ref.shape)


def conv_gemm_stats(patches, weights, *, tm, tk, tn):
    """patches (Mp,Kp) bf16, weights (Kp,Np) bf16 -> (y f32, stats f32)."""
    mp, kp = patches.shape
    np_ = weights.shape[1]
    mt, nt, kt = mp // tm, np_ // tn, kp // tk
    return pl.pallas_call(
        _gemm_stats_kernel,
        out_shape=(jax.ShapeDtypeStruct((mp, np_), jnp.float32),
                   jax.ShapeDtypeStruct((mt, 2, np_), jnp.float32)),
        grid=(mt, nt, kt),
        in_specs=[pl.BlockSpec((tm, tk), lambda i, j, k: (i, k)),
                  pl.BlockSpec((tk, tn), lambda i, j, k: (k, j))],
        out_specs=(pl.BlockSpec((tm, tn), lambda i, j, k: (i, j)),
                   pl.BlockSpec((1, 2, tn), lambda i, j, k: (i, 0, j))),
        compiler_params=pltpu.CompilerParams(
            dimension_semantics=("parallel", "parallel", "arbitrary"),
            vmem_limit_bytes=32 * 1024 * 1024),
    )(patches, weights)


# ----------------------------------------------------------------------------
# Kernel 2: apply folded BN (scale/shift) [+ residual, optionally with its own
#           folded BN] [+ ReLU].  grid = (M_tiles, N_tiles), both "parallel".
# ----------------------------------------------------------------------------
def _finalize_kernel(*refs, relu, res_mode):
    if res_mode == "bn":
        y_ref, s_ref, b_ref, ry_ref, rs_ref, rb_ref, o_ref = refs
    elif res_mode == "raw":
        y_ref, s_ref, b_ref, r_ref, o_ref = refs
    else:
        y_ref, s_ref, b_ref, o_ref = refs

    out = y_ref[...] * s_ref[...] + b_ref[...]
    if res_mode == "bn":
        out = out + (ry_ref[...] * rs_ref[...] + rb_ref[...])
    elif res_mode == "raw":
        out = out + r_ref[...]
    if relu:
        out = jnp.maximum(out, 0.0)
    o_ref[...] = out.astype(o_ref.dtype)


def bn_finalize(y, scale, shift, *, relu, tm, tn, out_dtype=jnp.float32,
                residual=None, res_scale=None, res_shift=None):
    mp, np_ = y.shape
    mt, nt = mp // tm, np_ // tn
    tile = pl.BlockSpec((tm, tn), lambda i, j: (i, j))
    row = pl.BlockSpec((1, tn), lambda i, j: (0, j))

    args = [y, scale, shift]
    in_specs = [tile, row, row]
    if residual is not None and res_scale is not None:
        res_mode = "bn"
        args += [residual, res_scale, res_shift]
        in_specs += [tile, row, row]
    elif residual is not None:
        res_mode = "raw"
        args += [residual]
        in_specs += [tile]
    else:
        res_mode = "none"

    kernel = functools.partial(_finalize_kernel, relu=relu, res_mode=res_mode)
    return pl.pallas_call(
        kernel,
        out_shape=jax.ShapeDtypeStruct((mp, np_), out_dtype),
        grid=(mt, nt),
        in_specs=in_specs,
        out_specs=tile,
        compiler_params=pltpu.CompilerParams(
            dimension_semantics=("parallel", "parallel"),
            vmem_limit_bytes=32 * 1024 * 1024),
    )(*args)


# ----------------------------------------------------------------------------
# Glue: im2col, weight reshaping, BN stat folding, full block forward
# ----------------------------------------------------------------------------
def _im2col(x_nhwc, ksize, stride, padding):
    B, H, W, C = x_nhwc.shape
    Ho = (H + 2 * padding - ksize) // stride + 1
    Wo = (W + 2 * padding - ksize) // stride + 1
    xp = jnp.pad(x_nhwc, ((0, 0), (padding, padding), (padding, padding), (0, 0)))
    cols = []
    for dy in range(ksize):
        for dx in range(ksize):
            sl = xp[:, dy:dy + stride * (Ho - 1) + 1:stride,
                       dx:dx + stride * (Wo - 1) + 1:stride, :]
            cols.append(sl)
    patches = jnp.concatenate(cols, axis=-1)             # (B, Ho, Wo, k*k*C)
    return patches.reshape(B * Ho * Wo, ksize * ksize * C), (B, Ho, Wo)


def _w2mat(w_oihw):
    # (Cout, Cin, kh, kw) -> (kh*kw*Cin, Cout), matching im2col (dy, dx, cin)
    co, ci, kh, kw = w_oihw.shape
    return jnp.transpose(w_oihw, (2, 3, 1, 0)).reshape(kh * kw * ci, co)


def _bn_affine(stats, gamma_pad, beta_pad, m_real, eps):
    """Partial (sum, sumsq) per M-tile -> folded per-channel scale/shift."""
    tot = stats.sum(axis=0)                    # (2, N_pad)
    mu = tot[0] / m_real
    ex2 = tot[1] / m_real
    var = jnp.maximum(ex2 - mu * mu, 0.0)      # clamp: E[y^2]-mu^2 in f32
    scale = gamma_pad * jax.lax.rsqrt(var + eps)
    shift = beta_pad - mu * scale
    return scale.reshape(1, -1), shift.reshape(1, -1)


def resnet_block_forward(x_nchw, params, eps=1e-5):
    stride = params["stride"]
    x = jnp.transpose(x_nchw, (0, 2, 3, 1)).astype(jnp.float32)   # NHWC
    B, H, W, Cin = x.shape
    Cout = params["conv1_w"].shape[0]
    Ho = (H + 2 - 3) // stride + 1
    Wo = (W + 2 - 3) // stride + 1
    M = B * Ho * Wo

    Np = _round_up(Cout, 128)                 # lane-dense output channels
    tm, m_pad = _pick_m_tile(M)
    tn = _pick_tile(Np, 256)

    def pad_gb(g, b):
        gp = jnp.zeros((Np,), jnp.float32).at[:Cout].set(g.astype(jnp.float32))
        bp = jnp.zeros((Np,), jnp.float32).at[:Cout].set(b.astype(jnp.float32))
        return gp, bp

    def prep_patches(a_nhwc, ksize, s, pad):
        p, _ = _im2col(a_nhwc.astype(jnp.bfloat16), ksize, s, pad)
        mr, k = p.shape
        kp = _round_up(k, 128)
        p = jnp.pad(p, ((0, m_pad - mr), (0, kp - k)))
        return p, k, kp

    def prep_w(w_oihw, k, kp):
        wm = _w2mat(w_oihw).astype(jnp.bfloat16)
        return jnp.pad(wm, ((0, kp - k), (0, Np - Cout)))

    # ---- conv1 -> bn1 -> relu (bf16 output: it only feeds conv2's MXU) -----
    p1, k1, k1p = prep_patches(x, 3, stride, 1)
    w1 = prep_w(params["conv1_w"], k1, k1p)
    y1, st1 = conv_gemm_stats(p1, w1, tm=tm, tk=_pick_tile(k1p, 512), tn=tn)
    g1, b1 = pad_gb(params["bn1_g"], params["bn1_b"])
    s1, h1 = _bn_affine(st1, g1, b1, M, eps)
    out1 = bn_finalize(y1, s1, h1, relu=True, tm=tm, tn=tn,
                       out_dtype=jnp.bfloat16)                    # (m_pad, Np)

    # ---- shortcut ----------------------------------------------------------
    if "convs_w" in params:
        ps, ks, ksp = prep_patches(x, 1, stride, 0)
        ws = prep_w(params["convs_w"], ks, ksp)
        ys, sts = conv_gemm_stats(ps, ws, tm=tm, tk=_pick_tile(ksp, 512), tn=tn)
        gs, bs = pad_gb(params["bns_g"], params["bns_b"])
        ss, hs = _bn_affine(sts, gs, bs, M, eps)
        res_kwargs = dict(residual=ys, res_scale=ss, res_shift=hs)
    else:
        r = x.reshape(M, Cin)                                     # identity
        r = jnp.pad(r, ((0, m_pad - M), (0, Np - Cin)))
        res_kwargs = dict(residual=r)

    # ---- conv2 -> bn2 -> (+ shortcut BN) -> relu  (single finalize pass) ---
    out1_nhwc = out1[:M, :Cout].reshape(B, Ho, Wo, Cout)
    p2, k2, k2p = prep_patches(out1_nhwc, 3, 1, 1)
    w2 = prep_w(params["conv2_w"], k2, k2p)
    y2, st2 = conv_gemm_stats(p2, w2, tm=tm, tk=_pick_tile(k2p, 512), tn=tn)
    g2, b2 = pad_gb(params["bn2_g"], params["bn2_b"])
    s2, h2 = _bn_affine(st2, g2, b2, M, eps)
    out2 = bn_finalize(y2, s2, h2, relu=True, tm=tm, tn=tn, **res_kwargs)

    out2 = out2[:M, :Cout].reshape(B, Ho, Wo, Cout)
    return jnp.transpose(out2, (0, 3, 1, 2))                      # NCHW


# ----------------------------------------------------------------------------
# Deterministic parameter init (matches nn.Conv2d / nn.BatchNorm2d shapes)
# ----------------------------------------------------------------------------
def init_params(key, in_c, out_c, stride):
    ks = jax.random.split(key, 9)
    p = {
        "stride": stride,
        "conv1_w": 0.1 * jax.random.normal(ks[0], (out_c, in_c, 3, 3), jnp.float32),
        "bn1_g": 1.0 + 0.1 * jax.random.normal(ks[1], (out_c,), jnp.float32),
        "bn1_b": 0.1 * jax.random.normal(ks[2], (out_c,), jnp.float32),
        "conv2_w": 0.1 * jax.random.normal(ks[3], (out_c, out_c, 3, 3), jnp.float32),
        "bn2_g": 1.0 + 0.1 * jax.random.normal(ks[4], (out_c,), jnp.float32),
        "bn2_b": 0.1 * jax.random.normal(ks[5], (out_c,), jnp.float32),
    }
    if stride != 1 or in_c != out_c:
        p["convs_w"] = 0.1 * jax.random.normal(ks[6], (out_c, in_c, 1, 1), jnp.float32)
        p["bns_g"] = 1.0 + 0.1 * jax.random.normal(ks[7], (out_c,), jnp.float32)
        p["bns_b"] = 0.1 * jax.random.normal(ks[8], (out_c,), jnp.float32)
    return p


# ----------------------------------------------------------------------------
# Pure-JAX reference (same semantics: training-mode BN with batch stats)
# ----------------------------------------------------------------------------
def resnet_block_ref(x_nchw, params):
    stride = params["stride"]
    x = jnp.transpose(x_nchw, (0, 2, 3, 1)).astype(jnp.float32)

    def conv(a, w, s, pad):
        return jax.lax.conv_general_dilated(
            a, jnp.transpose(w, (2, 3, 1, 0)), (s, s), ((pad, pad), (pad, pad)),
            dimension_numbers=("NHWC", "HWIO", "NHWC"))

    def bn(y, g, b, eps=1e-5):
        mu = y.mean(axis=(0, 1, 2), keepdims=True)
        var = ((y - mu) ** 2).mean(axis=(0, 1, 2), keepdims=True)
        return (y - mu) * jax.lax.rsqrt(var + eps) * g + b

    out = jax.nn.relu(bn(conv(x, params["conv1_w"], stride, 1),
                         params["bn1_g"], params["bn1_b"]))
    out = bn(conv(out, params["conv2_w"], 1, 1), params["bn2_g"], params["bn2_b"])
    if "convs_w" in params:
        sc = bn(conv(x, params["convs_w"], stride, 0), params["bns_g"], params["bns_b"])
    else:
        sc = x
    out = jax.nn.relu(out + sc)
    return jnp.transpose(out, (0, 3, 1, 2))


# ----------------------------------------------------------------------------
if __name__ == "__main__":
    key = jax.random.PRNGKey(0)

    # Case 1: projection shortcut (stride=2, channel change)
    B, Cin, H, W = 2, 4, 16, 16
    Cout, stride = 8, 2
    x = jax.random.normal(key, (B, Cin, H, W), jnp.float32)
    params = init_params(jax.random.PRNGKey(1), Cin, Cout, stride)
    out = jax.block_until_ready(resnet_block_forward(x, params))
    assert out.shape == (B, Cout, H // stride, W // stride), out.shape
    assert bool(jnp.all(jnp.isfinite(out)))
    ref = jax.block_until_ready(resnet_block_ref(x, params))
    assert bool(jnp.allclose(out, ref, atol=5e-2, rtol=5e-2)), (
        float(jnp.max(jnp.abs(out - ref))))

    # Case 2: identity shortcut (stride=1, same channels)
    Cin2 = Cout2 = 8
    x2 = jax.random.normal(jax.random.PRNGKey(2), (B, Cin2, H, W), jnp.float32)
    params2 = init_params(jax.random.PRNGKey(3), Cin2, Cout2, 1)
    out2 = jax.block_until_ready(resnet_block_forward(x2, params2))
    assert out2.shape == (B, Cout2, H, W), out2.shape
    ref2 = jax.block_until_ready(resnet_block_ref(x2, params2))
    assert bool(jnp.allclose(out2, ref2, atol=5e-2, rtol=5e-2)), (
        float(jnp.max(jnp.abs(out2 - ref2))))

    print("KERNEL_OK")
</pallas_src>

<mosaic_0001>
module attributes {stable_mosaic.version = 11 : i64} {
  func.func @_gemm_stats_kernel(%arg0: i32, %arg1: i32, %arg2: i32, %arg3: memref<128x128xbf16, #tpu.memory_space<vmem>>, %arg4: memref<128x128xbf16, #tpu.memory_space<vmem>>, %arg5: memref<128x128xf32, #tpu.memory_space<vmem>>, %arg6: memref<1x2x128xf32, #tpu.memory_space<vmem>>) attributes {dimension_semantics = [#tpu.dimension_semantics<parallel>, #tpu.dimension_semantics<parallel>, #tpu.dimension_semantics<arbitrary>], iteration_bounds = array<i64: 1, 1, 1>, scalar_prefetch = 0 : i64, scratch_operands = 0 : i64, tpu.core_type = #tpu.core_type<tc>, window_params = [{transform_indices = @transform_0, window_bounds = array<i64: 128, 128>}, {transform_indices = @transform_1, window_bounds = array<i64: 128, 128>}, {transform_indices = @transform_2, window_bounds = array<i64: 128, 128>}, {transform_indices = @transform_3, window_bounds = array<i64: 1, 2, 128>}]} {
    %c0_i32 = arith.constant 0 : i32
    %0 = arith.cmpi eq, %arg2, %c0_i32 : i32
    %1 = arith.extui %0 : i1 to i32
    %c0_i32_0 = arith.constant 0 : i32
    %2 = arith.cmpi ne, %1, %c0_i32_0 : i32
    scf.if %2 {
      %cst_10 = arith.constant 0.000000e+00 : f32
      %12 = vector.broadcast %cst_10 : f32 to vector<128x128xf32>
      %c0_11 = arith.constant 0 : index
      %c0_12 = arith.constant 0 : index
      %13 = vector.load %arg5[%c0_11, %c0_12] : memref<128x128xf32, #tpu.memory_space<vmem>>, vector<128x128xf32>
      tpu.vector_store %arg5[%c0_11, %c0_12], %12 {strides = array<i32>} : memref<128x128xf32, #tpu.memory_space<vmem>>, vector<128x128xf32>,
    } else {
    }
    %c0 = arith.constant 0 : index
    %c0_1 = arith.constant 0 : index
    %3 = vector.load %arg5[%c0, %c0_1] : memref<128x128xf32, #tpu.memory_space<vmem>>, vector<128x128xf32>
    %c0_2 = arith.constant 0 : index
    %c0_3 = arith.constant 0 : index
    %4 = vector.load %arg3[%c0_2, %c0_3] : memref<128x128xbf16, #tpu.memory_space<vmem>>, vector<128x128xbf16>
    %c0_4 = arith.constant 0 : index
    %c0_5 = arith.constant 0 : index
    %5 = vector.load %arg4[%c0_4, %c0_5] : memref<128x128xbf16, #tpu.memory_space<vmem>>, vector<128x128xbf16>
    %cst = arith.constant dense<0.000000e+00> : vector<128x128xf32>
    %6 = tpu.matmul %4, %5, %cst {dimension_numbers = #tpu.dot_dimension_numbers<[1], [0], [0], [1], [0, 0, 1, 1], [], []>} : vector<128x128xbf16>, vector<128x128xbf16>, vector<128x128xf32> -> vector<128x128xf32>
    %7 = arith.addf %3, %6 : vector<128x128xf32>
    %c0_6 = arith.constant 0 : index
    %c0_7 = arith.constant 0 : index
    %8 = vector.load %arg5[%c0_6, %c0_7] : memref<128x128xf32, #tpu.memory_space<vmem>>, vector<128x128xf32>
    tpu.vector_store %arg5[%c0_6, %c0_7], %7 {strides = array<i32>} : memref<128x128xf32, #tpu.memory_space<vmem>>, vector<128x128xf32>,
    %c0_i32_8 = arith.constant 0 : i32
    %9 = arith.cmpi eq, %arg2, %c0_i32_8 : i32
    %10 = arith.extui %9 : i1 to i32
    %c0_i32_9 = arith.constant 0 : i32
    %11 = arith.cmpi ne, %10, %c0_i32_9 : i32
    scf.if %11 {
      %c0_10 = arith.constant 0 : index
      %c0_11 = arith.constant 0 : index
      %12 = vector.load %arg5[%c0_10, %c0_11] : memref<128x128xf32, #tpu.memory_space<vmem>>, vector<128x128xf32>
      %cst_12 = arith.constant dense<0.000000e+00> : vector<128xf32>
      %13 = vector.multi_reduction <add>, %12, %cst_12 [0] : vector<128x128xf32> to vector<128xf32>
      %14 = vector.shape_cast %13 : vector<128xf32> to vector<1x128xf32>
      %15 = arith.mulf %12, %12 : vector<128x128xf32>
      %cst_13 = arith.constant dense<0.000000e+00> : vector<128xf32>
      %16 = vector.multi_reduction <add>, %15, %cst_13 [0] : vector<128x128xf32> to vector<128xf32>
      %17 = vector.shape_cast %16 : vector<128xf32> to vector<1x128xf32>
      %18 = tpu.concatenate %14, %17 in 0 : vector<1x128xf32>, vector<1x128xf32> -> vector<2x128xf32>
      %19 = vector.shape_cast %18 : vector<2x128xf32> to vector<1x2x128xf32>
      %c0_14 = arith.constant 0 : index
      %c0_15 = arith.constant 0 : index
      %c0_16 = arith.constant 0 : index
      %20 = vector.load %arg6[%c0_14, %c0_15, %c0_16] : memref<1x2x128xf32, #tpu.memory_space<vmem>>, vector<1x2x128xf32>
      tpu.vector_store %arg6[%c0_14, %c0_15, %c0_16], %19 {strides = array<i32>} : memref<1x2x128xf32, #tpu.memory_space<vmem>>, vector<1x2x128xf32>,
    } else {
    }
    return
  }
  func.func @transform_0(%arg0: i32, %arg1: i32, %arg2: i32) -> (i32, i32) {
    %c0_i32 = arith.constant 0 : i32
    return %arg0, %arg2 : i32, i32
  }
  func.func @transform_1(%arg0: i32, %arg1: i32, %arg2: i32) -> (i32, i32) {
    %c0_i32 = arith.constant 0 : i32
    return %arg2, %arg1 : i32, i32
  }
  func.func @transform_2(%arg0: i32, %arg1: i32, %arg2: i32) -> (i32, i32) {
    %c0_i32 = arith.constant 0 : i32
    return %arg0, %arg1 : i32, i32
  }
  func.func @transform_3(%arg0: i32, %arg1: i32, %arg2: i32) -> (i32, i32, i32) {
    %c0_i32 = arith.constant 0 : i32
    %c0_i32_0 = arith.constant 0 : i32
    return %arg0, %c0_i32, %arg1 : i32, i32, i32
  }
}

</mosaic_0001>

<llo_original>
// kernel: tpu_custom_call.1
$region0: #{tpu_custom_call.1}
  #allocation0 [shape = 'u32[]', space=smem, size = 0x4, offset = 0x4, fixed_abs, tag = 'smem constant byte address 0x4 - core index']
  #allocation1 [shape = 'u32[144,128]{1,0:T(1,128)}', space=vmem, size = 0x12000, scoped, tag = 'internal scratch']
  %s0 = inlined_call_operand.hbm [shape: bf16[128,128], index: 0, kind: input, shape index: {}]
  %s1 = inlined_call_operand.hbm [shape: bf16[128,128], index: 1, kind: input, shape index: {}]
  %s2 = inlined_call_operand.hbm [shape: f32[128,128], index: 2, kind: output, shape index: {0}]
  %s3 = inlined_call_operand.hbm [shape: f32[1,2,128], index: 3, kind: output, shape index: {1}]
  %4 = xla_tuple %s2, %s3
  %s5 = sld [smem:[#allocation0]]
  $region42: #{tpu_custom_call.1} parent=0
    _
  %s7 = ssub.s32 1, %s5
  %s8 = scalar_select 0, %s7, %s5
  $region1: #{tpu_custom_call.1} parent=0
    #allocation2 [shape = 'u8[32768]{0}', space=vmem, size = 0x8000, scoped, tag = 'input window, operand 0, single buffered']
    #allocation3 [shape = 's32[1]{0}', space=sflag, size = 0x4, scoped, tag = 'scoped memory for tpu_custom_call.1']
    #allocation4 [shape = 's32[1]{0}', space=sflag, size = 0x4, scoped, tag = 'scoped memory for tpu_custom_call.1']
    #allocation5 [shape = 'u8[32768]{0}', space=vmem, size = 0x8000, scoped, tag = 'input window, operand 1, single buffered']
    #allocation6 [shape = 's32[1]{0}', space=sflag, size = 0x4, scoped, tag = 'scoped memory for tpu_custom_call.1']
    #allocation7 [shape = 'u8[65536]{0}', space=vmem, size = 0x10000, scoped, tag = 'output window, operand 0, single buffered']
    #allocation8 [shape = 'u8[1024]{0}', space=vmem, size = 0x400, scoped, tag = 'output window, operand 1, single buffered']
    #allocation9 [shape = 's32[1]{0}', space=sflag, size = 0x4, scoped, tag = 'scoped memory for tpu_custom_call.1']
    %9 = vsyncpa [#allocation3], 0
    %10 = vsyncpa [#allocation6], 0
    %11 = vsyncpa [#allocation4], 0
    %12 = vsyncpa [#allocation9], 0
    // Predicated region
    $region2: #{tpu_custom_call.1} parent=1 // pred_check
      _
    $region3: #{tpu_custom_call.1} parent=1 // pred_check_branch
      %14 = sbr.rel (0) target = $region5
    $region4: #{tpu_custom_call.1} parent=1 // pred_region
      %s16 = ssub.s32 1024, 1024
      %17 = vsyncadd [#allocation3], %s16
      %s18 = sshll.u32 [#allocation2], 4
      %s19 = int_to_ptr.vmem [resolvable:$true] %s18
      %24 = dma.hbm_to_vmem [thread:$0]  %s0, 1024, %s19, [#allocation3], 64, 64, 4
    $region5: #{tpu_custom_call.1} parent=1 // pred_fallthru
      _
    // Predicated region
    $region6: #{tpu_custom_call.1} parent=1 // pred_check
      _
    $region7: #{tpu_custom_call.1} parent=1 // pred_check_branch
      %26 = sbr.rel (0) target = $region9
    $region8: #{tpu_custom_call.1} parent=1 // pred_region
      %s28 = ssub.s32 1024, 1024
      %29 = vsyncadd [#allocation6], %s28
      %s30 = sshll.u32 [#allocation5], 4
      %s31 = int_to_ptr.vmem [resolvable:$true] %s30
      %36 = dma.hbm_to_vmem [thread:$0]  %s1, 1024, %s31, [#allocation6], 64, 64, 4
    $region9: #{tpu_custom_call.1} parent=1 // pred_fallthru
      _
    // Predicated region
    $region10: #{tpu_custom_call.1} parent=1 // pred_check
      _
    $region11: #{tpu_custom_call.1} parent=1 // pred_check_branch
      %38 = sbr.rel (0) target = $region13
    $region12: #{tpu_custom_call.1} parent=1 // pred_region
      %39 = dma.done [#allocation3], 1024
    $region13: #{tpu_custom_call.1} parent=1 // pred_fallthru
      _
    // Predicated region
    $region14: #{tpu_custom_call.1} parent=1 // pred_check
      _
    $region15: #{tpu_custom_call.1} parent=1 // pred_check_branch
      %41 = sbr.rel (0) target = $region17
    $region16: #{tpu_custom_call.1} parent=1 // pred_region
      %42 = dma.done [#allocation6], 1024
    $region17: #{tpu_custom_call.1} parent=1 // pred_fallthru
      _
    %p44 = scmp.eq.s32.totalorder 0, 0
    // Predicated region
    $region18: #{tpu_custom_call.1} parent=1 // pred_check
      %p45 = pneg %p44
    $region19: #{tpu_custom_call.1} parent=1 // pred_check_branch
      %47 = sbr.rel (%p45) target = $region21
    $region20: #{tpu_custom_call.1} parent=1 // pred_region
      %48 = vst [vmem:[#allocation7] sm:$0xff] 0.0
      %49 = vst [vmem:[#allocation7 + $0x8] sm:$0xff] 0.0
      %50 = vst [vmem:[#allocation7 + $0x10] sm:$0xff] 0.0
      %51 = vst [vmem:[#allocation7 + $0x18] sm:$0xff] 0.0
      %52 = vst [vmem:[#allocation7 + $0x20] sm:$0xff] 0.0
      %53 = vst [vmem:[#allocation7 + $0x28] sm:$0xff] 0.0
      %54 = vst [vmem:[#allocation7 + $0x30] sm:$0xff] 0.0
      %55 = vst [vmem:[#allocation7 + $0x38] sm:$0xff] 0.0
      %56 = vst [vmem:[#allocation7 + $0x40] sm:$0xff] 0.0
      %57 = vst [vmem:[#allocation7 + $0x48] sm:$0xff] 0.0
      %58 = vst [vmem:[#allocation7 + $0x50] sm:$0xff] 0.0
      %59 = vst [vmem:[#allocation7 + $0x58] sm:$0xff] 0.0
      %60 = vst [vmem:[#allocation7 + $0x60] sm:$0xff] 0.0
      %61 = vst [vmem:[#allocation7 + $0x68] sm:$0xff] 0.0
      %62 = vst [vmem:[#allocation7 + $0x70] sm:$0xff] 0.0
      %63 = vst [vmem:[#allocation7 + $0x78] sm:$0xff] 0.0
    $region21: #{tpu_custom_call.1} parent=1 // pred_fallthru
      _
    %v64 = vld [vmem:[#allocation7] sm:$0xff]
    %v65 = vld [vmem:[#allocation7 + $0x8] sm:$0xff]
    %v66 = vld [vmem:[#allocation7 + $0x10] sm:$0xff]
    %v67 = vld [vmem:[#allocation7 + $0x18] sm:$0xff]
    %v68 = vld [vmem:[#allocation7 + $0x20] sm:$0xff]
    %v69 = vld [vmem:[#allocation7 + $0x28] sm:$0xff]
    %v70 = vld [vmem:[#allocation7 + $0x30] sm:$0xff]
    %v71 = vld [vmem:[#allocation7 + $0x38] sm:$0xff]
    %v72 = vld [vmem:[#allocation7 + $0x40] sm:$0xff]
    %v73 = vld [vmem:[#allocation7 + $0x48] sm:$0xff]
    %v74 = vld [vmem:[#allocation7 + $0x50] sm:$0xff]
    %v75 = vld [vmem:[#allocation7 + $0x58] sm:$0xff]
    %v76 = vld [vmem:[#allocation7 + $0x60] sm:$0xff]
    %v77 = vld [vmem:[#allocation7 + $0x68] sm:$0xff]
    %v78 = vld [vmem:[#allocation7 + $0x70] sm:$0xff]
    %v79 = vld [vmem:[#allocation7 + $0x78] sm:$0xff]
    %v80 = vld [vmem:[#allocation2] sm:$0xf]
    %v81 = vld [vmem:[#allocation2 + $0x4] sm:$0xf]
    %v82 = vld [vmem:[#allocation2 + $0x8] sm:$0xf]
    %v83 = vld [vmem:[#allocation2 + $0xc] sm:$0xf]
    %v84 = vld [vmem:[#allocation2 + $0x10] sm:$0xf]
    %v85 = vld [vmem:[#allocation2 + $0x14] sm:$0xf]
    %v86 = vld [vmem:[#allocation2 + $0x18] sm:$0xf]
    %v87 = vld [vmem:[#allocation2 + $0x1c] sm:$0xf]
    %v88 = vld [vmem:[#allocation2 + $0x20] sm:$0xf]
    %v89 = vld [vmem:[#allocation2 + $0x24] sm:$0xf]
    %v90 = vld [vmem:[#allocation2 + $0x28] sm:$0xf]
    %v91 = vld [vmem:[#allocation2 + $0x2c] sm:$0xf]
    %v92 = vld [vmem:[#allocation2 + $0x30] sm:$0xf]
    %v93 = vld [vmem:[#allocation2 + $0x34] sm:$0xf]
    %v94 = vld [vmem:[#allocation2 + $0x38] sm:$0xf]
    %v95 = vld [vmem:[#allocation2 + $0x3c] sm:$0xf]
    %v96 = vld [vmem:[#allocation5] sm:$0xf]
    %v97 = vld [vmem:[#allocation5 + $0x4] sm:$0xf]
    %v98 = vld [vmem:[#allocation5 + $0x8] sm:$0xf]
    %v99 = vld [vmem:[#allocation5 + $0xc] sm:$0xf]
    %v100 = vld [vmem:[#allocation5 + $0x10] sm:$0xf]
    %v101 = vld [vmem:[#allocation5 + $0x14] sm:$0xf]
    %v102 = vld [vmem:[#allocation5 + $0x18] sm:$0xf]
    %v103 = vld [vmem:[#allocation5 + $0x1c] sm:$0xf]
    %v104 = vld [vmem:[#allocation5 + $0x20] sm:$0xf]
    %v105 = vld [vmem:[#allocation5 + $0x24] sm:$0xf]
    %v106 = vld [vmem:[#allocation5 + $0x28] sm:$0xf]
    %v107 = vld [vmem:[#allocation5 + $0x2c] sm:$0xf]
    %v108 = vld [vmem:[#allocation5 + $0x30] sm:$0xf]
    %v109 = vld [vmem:[#allocation5 + $0x34] sm:$0xf]
    %v110 = vld [vmem:[#allocation5 + $0x38] sm:$0xf]
    %v111 = vld [vmem:[#allocation5 + $0x3c] sm:$0xf]
    %v128 = vunpack.c.l.b16 %v80
    %v129 = vunpack.c.l.b16 %v81
    %v130 = vunpack.c.l.b16 %v82
    %v131 = vunpack.c.l.b16 %v83
    %v132 = vunpack.c.l.b16 %v84
    %v133 = vunpack.c.l.b16 %v85
    %v134 = vunpack.c.l.b16 %v86
    %v135 = vunpack.c.l.b16 %v87
    %v136 = vunpack.c.l.b16 %v88
    %v137 = vunpack.c.l.b16 %v89
    %v138 = vunpack.c.l.b16 %v90
    %v139 = vunpack.c.l.b16 %v91
    %v140 = vunpack.c.l.b16 %v92
    %v141 = vunpack.c.l.b16 %v93
    %v142 = vunpack.c.l.b16 %v94
    %v143 = vunpack.c.l.b16 %v95
    %v144 = vpack.c.b16 %v129, %v128
    %v145 = vpack.c.b16 %v131, %v130
    %v146 = vpack.c.b16 %v133, %v132
    %v147 = vpack.c.b16 %v135, %v134
    %v148 = vpack.c.b16 %v137, %v136
    %v149 = vpack.c.b16 %v139, %v138
    %v150 = vpack.c.b16 %v141, %v140
    %v151 = vpack.c.b16 %v143, %v142
    %v176 = vunpack.c.l.b16 %v96
    %v177 = vunpack.c.l.b16 %v97
    %v178 = vunpack.c.l.b16 %v98
    %v179 = vunpack.c.l.b16 %v99
    %v180 = vunpack.c.l.b16 %v100
    %v181 = vunpack.c.l.b16 %v101
    %v182 = vunpack.c.l.b16 %v102
    %v183 = vunpack.c.l.b16 %v103
    %v184 = vunpack.c.l.b16 %v104
    %v185 = vunpack.c.l.b16 %v105
    %v186 = vunpack.c.l.b16 %v106
    %v187 = vunpack.c.l.b16 %v107
    %v188 = vunpack.c.l.b16 %v108
    %v189 = vunpack.c.l.b16 %v109
    %v190 = vunpack.c.l.b16 %v110
    %v191 = vunpack.c.l.b16 %v111
    %v192 = vpack.c.b16 %v177, %v176
    %v193 = vpack.c.b16 %v179, %v178
    %v194 = vpack.c.b16 %v181, %v180
    %v195 = vpack.c.b16 %v183, %v182
    %v196 = vpack.c.b16 %v185, %v184
    %v197 = vpack.c.b16 %v187, %v186
    %v198 = vpack.c.b16 %v189, %v188
    %v199 = vpack.c.b16 %v191, %v190
    %208 = vmatprep.subr.bf16.mxu0 0
    %209 = vmatpush1.bf16.msra.mxu0 %v192
    %210 = vmatprep.subr.bf16.mxu0 0
    %211 = vmatpush1.bf16.msra.mxu0 %v193
    %212 = vmatprep.subr.bf16.mxu0 0
    %213 = vmatpush1.bf16.msra.mxu0 %v194
    %214 = vmatprep.subr.bf16.mxu0 0
    %215 = vmatpush1.bf16.msra.mxu0 %v195
    %216 = vmatprep.subr.bf16.mxu0 0
    %217 = vmatpush1.bf16.msra.mxu0 %v196
    %218 = vmatprep.subr.bf16.mxu0 0
    %219 = vmatpush1.bf16.msra.mxu0 %v197
    %220 = vmatprep.subr.bf16.mxu0 0
    %221 = vmatpush1.bf16.msra.mxu0 %v198
    %222 = vmatprep.subr.bf16.mxu0 0
    %223 = vmatpush1.bf16.msra.mxu0 %v199
    %224 = vmatprep.subr.bf16.mxu0 0
    %225 = vmatpush1.bf16.msra.mxu0 0
    %226 = vmatprep.subr.bf16.mxu0 0
    %227 = vmatpush1.bf16.msra.mxu0 0
    %228 = vmatprep.subr.bf16.mxu0 0
    %229 = vmatpush1.bf16.msra.mxu0 0
    %230 = vmatprep.subr.bf16.mxu0 0
    %231 = vmatpush1.bf16.msra.mxu0 0
    %232 = vmatprep.subr.bf16.mxu0 0
    %233 = vmatpush1.bf16.msra.mxu0 0
    %234 = vmatprep.subr.bf16.mxu0 0
    %235 = vmatpush1.bf16.msra.mxu0 0
    %236 = vmatprep.subr.bf16.mxu0 0
    %237 = vmatpush1.bf16.msra.mxu0 0
    %238 = vmatprep.subr.bf16.mxu0 0
    %239 = vmatpush1.bf16.msra.mxu0 0
    %240 = vmatprep.mubr.bf16.mxu0 0
    %241 = vmatmul.mubr.bf16.gmra.mrb[0].mxu0 %v144
    %v242 = vpop.f32.mrb[0].mxu0
    %v243 = vadd.f32 0.0, %v242
    %v244 = vpop.f32.mrb[0].mxu0
    %v245 = vpop.f32.mrb[0].mxu0
    %v246 = vadd.f32 0.0, %v245
    %v247 = vpop.f32.mrb[0].mxu0
    %248 = vmatprep.mubr.bf16.mxu0 0
    %249 = vmatmul.mubr.bf16.gmra.mrb[0].mxu0 %v145
    %v250 = vpop.f32.mrb[0].mxu0
    %v251 = vadd.f32 0.0, %v250
    %v252 = vpop.f32.mrb[0].mxu0
    %v253 = vpop.f32.mrb[0].mxu0
    %v254 = vadd.f32 0.0, %v253
    %v255 = vpop.f32.mrb[0].mxu0
    %256 = vmatprep.mubr.bf16.mxu0 0
    %257 = vmatmul.mubr.bf16.gmra.mrb[0].mxu0 %v146
    %v258 = vpop.f32.mrb[0].mxu0
    %v259 = vadd.f32 0.0, %v258
    %v260 = vpop.f32.mrb[0].mxu0
    %v261 = vpop.f32.mrb[0].mxu0
    %v262 = vadd.f32 0.0, %v261
    %v263 = vpop.f32.mrb[0].mxu0
    %264 = vmatprep.mubr.bf16.mxu0 0
    %265 = vmatmul.mubr.bf16.gmra.mrb[0].mxu0 %v147
    %v266 = vpop.f32.mrb[0].mxu0
    %v267 = vadd.f32 0.0, %v266
    %v268 = vpop.f32.mrb[0].mxu0
    %v269 = vpop.f32.mrb[0].mxu0
    %v270 = vadd.f32 0.0, %v269
    %v271 = vpop.f32.mrb[0].mxu0
    %272 = vmatprep.mubr.bf16.mxu0 0
    %273 = vmatmul.mubr.bf16.gmra.mrb[0].mxu0 %v148
    %v274 = vpop.f32.mrb[0].mxu0
    %v275 = vadd.f32 0.0, %v274
    %v276 = vpop.f32.mrb[0].mxu0
    %v277 = vpop.f32.mrb[0].mxu0
    %v278 = vadd.f32 0.0, %v277
    %v279 = vpop.f32.mrb[0].mxu0
    %280 = vmatprep.mubr.bf16.mxu0 0
    %281 = vmatmul.mubr.bf16.gmra.mrb[0].mxu0 %v149
    %v282 = vpop.f32.mrb[0].mxu0
    %v283 = vadd.f32 0.0, %v282
    %v284 = vpop.f32.mrb[0].mxu0
    %v285 = vpop.f32.mrb[0].mxu0
    %v286 = vadd.f32 0.0, %v285
    %v287 = vpop.f32.mrb[0].mxu0
    %288 = vmatprep.mubr.bf16.mxu0 0
    %289 = vmatmul.mubr.bf16.gmra.mrb[0].mxu0 %v150
    %v290 = vpop.f32.mrb[0].mxu0
    %v291 = vadd.f32 0.0, %v290
    %v292 = vpop.f32.mrb[0].mxu0
    %v293 = vpop.f32.mrb[0].mxu0
    %v294 = vadd.f32 0.0, %v293
    %v295 = vpop.f32.mrb[0].mxu0
    %296 = vmatprep.mubr.bf16.mxu0 0
    %297 = vmatmul.mubr.bf16.gmra.mrb[0].mxu0 %v151
    %v298 = vpop.f32.mrb[0].mxu0
    %v299 = vadd.f32 0.0, %v298
    %v300 = vpop.f32.mrb[0].mxu0
    %v301 = vpop.f32.mrb[0].mxu0
    %v302 = vadd.f32 0.0, %v301
    %v303 = vpop.f32.mrb[0].mxu0
    %304 = vdwg.mxu0
    %v305 = vadd.f32 %v64, %v243
    %v306 = vadd.f32 %v65, %v246
    %v307 = vadd.f32 %v66, %v251
    %v308 = vadd.f32 %v67, %v254
    %v309 = vadd.f32 %v68, %v259
    %v310 = vadd.f32 %v69, %v262
    %v311 = vadd.f32 %v70, %v267
    %v312 = vadd.f32 %v71, %v270
    %v313 = vadd.f32 %v72, %v275
    %v314 = vadd.f32 %v73, %v278
    %v315 = vadd.f32 %v74, %v283
    %v316 = vadd.f32 %v75, %v286
    %v317 = vadd.f32 %v76, %v291
    %v318 = vadd.f32 %v77, %v294
    %v319 = vadd.f32 %v78, %v299
    %v320 = vadd.f32 %v79, %v302
    %321 = vst [vmem:[#allocation7] sm:$0xff] %v305
    %322 = vst [vmem:[#allocation7 + $0x8] sm:$0xff] %v306
    %323 = vst [vmem:[#allocation7 + $0x10] sm:$0xff] %v307
    %324 = vst [vmem:[#allocation7 + $0x18] sm:$0xff] %v308
    %325 = vst [vmem:[#allocation7 + $0x20] sm:$0xff] %v309
    %326 = vst [vmem:[#allocation7 + $0x28] sm:$0xff] %v310
    %327 = vst [vmem:[#allocation7 + $0x30] sm:$0xff] %v311
    %328 = vst [vmem:[#allocation7 + $0x38] sm:$0xff] %v312
    %329 = vst [vmem:[#allocation7 + $0x40] sm:$0xff] %v313
    %330 = vst [vmem:[#allocation7 + $0x48] sm:$0xff] %v314
    %331 = vst [vmem:[#allocation7 + $0x50] sm:$0xff] %v315
    %332 = vst [vmem:[#allocation7 + $0x58] sm:$0xff] %v316
    %333 = vst [vmem:[#allocation7 + $0x60] sm:$0xff] %v317
    %334 = vst [vmem:[#allocation7 + $0x68] sm:$0xff] %v318
    %335 = vst [vmem:[#allocation7 + $0x70] sm:$0xff] %v319
    %336 = vst [vmem:[#allocation7 + $0x78] sm:$0xff] %v320
    // Predicated region
    $region22: #{tpu_custom_call.1} parent=1 // pred_check
      %p337 = pneg %p44
    $region23: #{tpu_custom_call.1} parent=1 // pred_check_branch
      %339 = sbr.rel (%p337) target = $region25
    $region24: #{tpu_custom_call.1} parent=1 // pred_region
      %v340 = vld [vmem:[#allocation7] sm:$0xff]
      %v341 = vld [vmem:[#allocation7 + $0x8] sm:$0xff]
      %v342 = vld [vmem:[#allocation7 + $0x10] sm:$0xff]
      %v343 = vld [vmem:[#allocation7 + $0x18] sm:$0xff]
      %v344 = vld [vmem:[#allocation7 + $0x20] sm:$0xff]
      %v345 = vld [vmem:[#allocation7 + $0x28] sm:$0xff]
      %v346 = vld [vmem:[#allocation7 + $0x30] sm:$0xff]
      %v347 = vld [vmem:[#allocation7 + $0x38] sm:$0xff]
      %v348 = vld [vmem:[#allocation7 + $0x40] sm:$0xff]
      %v349 = vld [vmem:[#allocation7 + $0x48] sm:$0xff]
      %v350 = vld [vmem:[#allocation7 + $0x50] sm:$0xff]
      %v351 = vld [vmem:[#allocation7 + $0x58] sm:$0xff]
      %v352 = vld [vmem:[#allocation7 + $0x60] sm:$0xff]
      %v353 = vld [vmem:[#allocation7 + $0x68] sm:$0xff]
      %v354 = vld [vmem:[#allocation7 + $0x70] sm:$0xff]
      %v355 = vld [vmem:[#allocation7 + $0x78] sm:$0xff]
      %v356 = vadd.f32 %v340, %v341
      %v357 = vadd.f32 %v356, %v342
      %v358 = vadd.f32 %v357, %v343
      %v359 = vadd.f32 %v358, %v344
      %v360 = vadd.f32 %v359, %v345
      %v361 = vadd.f32 %v360, %v346
      %v362 = vadd.f32 %v361, %v347
      %v363 = vadd.f32 %v362, %v348
      %v364 = vadd.f32 %v363, %v349
      %v365 = vadd.f32 %v364, %v350
      %v366 = vadd.f32 %v365, %v351
      %v367 = vadd.f32 %v366, %v352
      %v368 = vadd.f32 %v367, %v353
      %v369 = vadd.f32 %v368, %v354
      %v370 = vadd.f32 %v369, %v355
      %v371 = vrot.slane %v370, 4
      %v372 = vadd.f32 %v370, %v371
      %v373 = vrot.slane %v372, 2
      %v374 = vadd.f32 %v372, %v373
      %v375 = vrot.slane %v374, 1
      %v376 = vadd.f32 %v374, %v375
      %v377 = vmul.f32 %v340, %v340
      %v378 = vmul.f32 %v341, %v341
      %v379 = vmul.f32 %v342, %v342
      %v380 = vmul.f32 %v343, %v343
      %v381 = vmul.f32 %v344, %v344
      %v382 = vmul.f32 %v345, %v345
      %v383 = vmul.f32 %v346, %v346
      %v384 = vmul.f32 %v347, %v347
      %v385 = vmul.f32 %v348, %v348
      %v386 = vmul.f32 %v349, %v349
      %v387 = vmul.f32 %v350, %v350
      %v388 = vmul.f32 %v351, %v351
      %v389 = vmul.f32 %v352, %v352
      %v390 = vmul.f32 %v353, %v353
      %v391 = vmul.f32 %v354, %v354
      %v392 = vmul.f32 %v355, %v355
      %v393 = vadd.f32 %v377, %v378
      %v394 = vadd.f32 %v393, %v379
      %v395 = vadd.f32 %v394, %v380
      %v396 = vadd.f32 %v395, %v381
      %v397 = vadd.f32 %v396, %v382
      %v398 = vadd.f32 %v397, %v383
      %v399 = vadd.f32 %v398, %v384
      %v400 = vadd.f32 %v399, %v385
      %v401 = vadd.f32 %v400, %v386
      %v402 = vadd.f32 %v401, %v387
      %v403 = vadd.f32 %v402, %v388
      %v404 = vadd.f32 %v403, %v389
      %v405 = vadd.f32 %v404, %v390
      %v406 = vadd.f32 %v405, %v391
      %v407 = vadd.f32 %v406, %v392
      %v408 = vrot.slane %v407, 4
      %v409 = vadd.f32 %v407, %v408
      %v410 = vrot.slane %v409, 2
      %v411 = vadd.f32 %v409, %v410
      %v412 = vrot.slane %v411, 1
      %v413 = vadd.f32 %v411, %v412
      %vm414 = vcmask 1040384
      %v415 = vsel %vm414, %v376, %v413
      %416 = vst [vmem:[#allocation8] sm:$0x3] %v415
    $region25: #{tpu_custom_call.1} parent=1 // pred_fallthru
      _
    // Predicated region
    $region26: #{tpu_custom_call.1} parent=1 // pred_check
      _
    $region27: #{tpu_custom_call.1} parent=1 // pred_check_branch
      %418 = sbr.rel (0) target = $region29
    $region28: #{tpu_custom_call.1} parent=1 // pred_region
      %s420 = ssub.s32 2048, 2048
      %421 = vsyncadd [#allocation4], %s420
      %s422 = sshll.u32 [#allocation7], 4
      %s423 = int_to_ptr.vmem [resolvable:$true] %s422
      %428 = dma.vmem_to_hbm [thread:$0]  %s423, 2048, %s2, [#allocation4], 128, 128, 8
    $region29: #{tpu_custom_call.1} parent=1 // pred_fallthru
      _
    // Predicated region
    $region30: #{tpu_custom_call.1} parent=1 // pred_check
      _
    $region31: #{tpu_custom_call.1} parent=1 // pred_check_branch
      %430 = sbr.rel (0) target = $region33
    $region32: #{tpu_custom_call.1} parent=1 // pred_region
      %s432 = ssub.s32 32, 32
      %433 = vsyncadd [#allocation9], %s432
      %s435 = sshll.u32 [#allocation8], 4
      %s436 = int_to_ptr.vmem [resolvable:$true] %s435
      %438 = dma.vmem_to_hbm [thread:$0]  %s436, 32, %s3, [#allocation9]
    $region33: #{tpu_custom_call.1} parent=1 // pred_fallthru
      _
    // Predicated region
    $region34: #{tpu_custom_call.1} parent=1 // pred_check
      _
    $region35: #{tpu_custom_call.1} parent=1 // pred_check_branch
      %440 = sbr.rel (0) target = $region37
    $region36: #{tpu_custom_call.1} parent=1 // pred_region
      %441 = dma.done [#allocation4], 2048
    $region37: #{tpu_custom_call.1} parent=1 // pred_fallthru
      _
    // Predicated region
    $region38: #{tpu_custom_call.1} parent=1 // pred_check
      _
    $region39: #{tpu_custom_call.1} parent=1 // pred_check_branch
      %443 = sbr.rel (0) target = $region41
    $region40: #{tpu_custom_call.1} parent=1 // pred_region
      %444 = dma.done [#allocation9], 32
    $region41: #{tpu_custom_call.1} parent=1 // pred_fallthru
      _
    %445 = vsyncpa [#allocation3], 1
    %446 = vsyncpa [#allocation6], 1
    %447 = vsyncpa [#allocation4], 1
    %448 = vsyncpa [#allocation9], 1

</llo_original>
